<compile_context>
chip_gen: v5e
topology: v5e:2x2
jax: 0.10.0
libtpu: 0.0.40
codegen_flags: <defaults>
</compile_context>

<pallas_src>
import functools
import math

import jax
import jax.numpy as jnp
from jax.experimental import pallas as pl
from jax.experimental.pallas import tpu as pltpu


def _se_kernel(x_ref, w1_ref, b1_ref, w2_ref, b2_ref, o_ref, *, groups, hw, use_mxu):
    # x_ref block: (bn, Cg, L) with L = groups*hw, lane-dense when groups>1.
    x = x_ref[...]
    bn, cg, L = x.shape
    inv_hw = 1.0 / hw

    if groups > 1:
        lane = jax.lax.broadcasted_iota(jnp.int32, (1, 1, L), 2)
        masks = [(lane >= g * hw) & (lane < (g + 1) * hw) for g in range(groups)]
    else:
        masks = [None]

    # ---- global average pool + fc1, accumulated over channel groups --------
    # pooled_g[b, c'] = mean over spatial of channel c = c'*groups + g.
    y1 = b1_ref[...].astype(jnp.float32)                       # (1, Cmid)
    for g in range(groups):
        xg = x if masks[g] is None else jnp.where(masks[g], x, 0)
        pooled_g = jnp.sum(xg, axis=-1, dtype=jnp.float32) * inv_hw   # (bn, Cg)
        w1g = w1_ref[g].astype(jnp.float32)                    # (Cmid, Cg)
        if use_mxu:
            y1 = y1 + jax.lax.dot_general(
                pooled_g, w1g, (((1,), (1,)), ((), ())),
                preferred_element_type=jnp.float32)
        else:
            # Tiny matvec: VPU broadcast-multiply + lane reduce beats MXU
            # fill/drain latency at these sizes.
            y1 = y1 + jnp.sum(pooled_g[:, None, :] * w1g[None, :, :], axis=-1)
    y1 = jnp.maximum(y1, 0.0)                                   # (bn, Cmid)

    # ---- fc2 + sigmoid per group, expand scale over lanes, multiply --------
    scale_full = None
    for g in range(groups):
        w2g = w2_ref[g].astype(jnp.float32)                     # (Cg, Cmid)
        if use_mxu:
            logits = jax.lax.dot_general(
                y1, w2g, (((1,), (1,)), ((), ())),
                preferred_element_type=jnp.float32)
        else:
            logits = jnp.sum(y1[:, None, :] * w2g[None, :, :], axis=-1)
        s_g = jax.nn.sigmoid(logits + b2_ref[g].astype(jnp.float32))   # (bn, Cg)
        if masks[g] is None:
            term = jnp.broadcast_to(s_g[:, :, None], (bn, cg, L))
        else:
            term = jnp.where(masks[g], s_g[:, :, None], 0.0)
        scale_full = term if scale_full is None else scale_full + term

    # Multiply in the input dtype (exact for f32; matches low-precision
    # inference behavior for bf16/fp8 inputs).
    o_ref[...] = x * scale_full.astype(x.dtype)


def se_module_forward(x, w1, b1, w2, b2):
    """x: (N, C, H, W); returns x * sigmoid(fc2(relu(fc1(avgpool(x)))))."""
    N, C, H, W = x.shape
    HW = H * W
    Cmid = w1.shape[0]
    itemsize = jnp.dtype(x.dtype).itemsize

    # ---- lane-dense channel grouping (G*HW is a multiple of 128) -----------
    G = 128 // math.gcd(HW, 128)
    if G > 1 and (C % G != 0 or G > 8):
        # TODO(synk): pad / HW-tile for awkward spatial sizes (49, 196, ...);
        # fall back to the masked-store path for now.
        G = 1
    Cg = C // G
    L = G * HW

    x_view = x.reshape(N, Cg, L)                 # free, contiguous reshape

    # Group-sliced weights so the kernel never needs lane-split reshapes.
    w1s = jnp.stack([w1[:, g::G] for g in range(G)])                  # (G, Cmid, Cg)
    w2s = jnp.stack([w2[g::G, :] for g in range(G)])                  # (G, Cg, Cmid)
    b2s = jnp.stack([b2[g::G].reshape(1, Cg) for g in range(G)])      # (G, 1, Cg)
    b1r = b1.reshape(1, Cmid)

    use_mxu = (C >= 128) and (Cmid >= 8)

    # ---- generation-aware VMEM budget & batch tiling ------------------------
    vmem_cap = 64 * 1024 * 1024                  # conservative (v7x) default
    try:
        info = pltpu.get_tpu_info()
        for attr in ("vmem_capacity_bytes", "vmem_bytes", "vmem_size_bytes"):
            v = getattr(info, attr, None)
            if v:
                vmem_cap = int(v)
                break
    except Exception:
        pass
    vmem_limit = min(112 * 1024 * 1024, max(32 * 1024 * 1024, (vmem_cap * 3) // 4))

    param_bytes = sum(int(a.size) * jnp.dtype(a.dtype).itemsize
                      for a in (w1s, b1r, w2s, b2s))
    headroom = 4 * 1024 * 1024
    # Input + output blocks, each double-buffered by the pipeline.
    block_budget = max(512 * 1024, (vmem_limit - param_bytes - headroom) // 4)

    bytes_per_n = C * HW * itemsize
    bn = int(max(1, min(N, block_budget // max(1, bytes_per_n))))
    steps = -(-N // bn)
    total_bytes = N * bytes_per_n
    if steps == 1 and N > 1 and total_bytes > 8 * 1024 * 1024:
        # Big enough that pipelining / megacore split beats per-step overhead.
        bn = -(-N // 2)
        steps = -(-N // bn)
    elif steps > 2 and steps % 2 == 1:
        # Even step count so v7x's two TensorCores stay balanced.
        bn = -(-N // (steps + 1))
        steps = -(-N // bn)

    cost = pl.CostEstimate(
        flops=3 * N * C * HW + 4 * N * C * Cmid,
        transcendentals=N * C,                    # sigmoid
        bytes_accessed=2 * N * C * HW * itemsize + param_bytes,
    )

    kernel = functools.partial(_se_kernel, groups=G, hw=HW, use_mxu=use_mxu)

    out_view = pl.pallas_call(
        kernel,
        out_shape=jax.ShapeDtypeStruct((N, Cg, L), x.dtype),
        grid_spec=pltpu.PrefetchScalarGridSpec(
            num_scalar_prefetch=0,
            grid=(steps,),
            in_specs=[
                pl.BlockSpec((bn, Cg, L), lambda n: (n, 0, 0)),
                pl.BlockSpec((G, Cmid, Cg), lambda n: (0, 0, 0)),
                pl.BlockSpec((1, Cmid), lambda n: (0, 0)),
                pl.BlockSpec((G, Cg, Cmid), lambda n: (0, 0, 0)),
                pl.BlockSpec((G, 1, Cg), lambda n: (0, 0, 0)),
            ],
            out_specs=pl.BlockSpec((bn, Cg, L), lambda n: (n, 0, 0)),
        ),
        compiler_params=pltpu.CompilerParams(
            dimension_semantics=("parallel",),
            vmem_limit_bytes=int(vmem_limit),
        ),
        cost_estimate=cost,
    )(x_view, w1s, b1r, w2s, b2s)

    return out_view.reshape(N, C, H, W)


def _reference(x, w1, b1, w2, b2):
    pooled = jnp.mean(x, axis=(2, 3))                        # (N, C)
    y1 = jnp.maximum(pooled @ w1.T + b1, 0.0)                # (N, Cmid)
    y2 = jax.nn.sigmoid(y1 @ w2.T + b2)                      # (N, C)
    return x * y2[:, :, None, None]


if __name__ == "__main__":
    # Small shapes consistent with SEModule(channels=32, reduction=16).
    N, C, H, W = 2, 32, 8, 8
    reduction = 16
    Cmid = C // reduction

    key = jax.random.PRNGKey(0)
    kx, k1, k2, k3, k4 = jax.random.split(key, 5)

    x = jax.random.normal(kx, (N, C, H, W), dtype=jnp.float32)
    # Conv2d 1x1 weights squeezed to 2D.
    w1 = jax.random.normal(k1, (Cmid, C), dtype=jnp.float32) * 0.1
    b1 = jax.random.normal(k2, (Cmid,), dtype=jnp.float32) * 0.1
    w2 = jax.random.normal(k3, (C, Cmid), dtype=jnp.float32) * 0.1
    b2 = jax.random.normal(k4, (C,), dtype=jnp.float32) * 0.1

    out = jax.block_until_ready(se_module_forward(x, w1, b1, w2, b2))

    ref = _reference(x, w1, b1, w2, b2)
    assert out.shape == (N, C, H, W)
    assert jnp.allclose(out, ref, atol=1e-5, rtol=1e-5), "mismatch vs reference"

    print("KERNEL_OK")
</pallas_src>

<mosaic_0001>
module attributes {stable_mosaic.version = 11 : i64} {
  func.func @_se_kernel(%arg0: i32, %arg1: memref<2x16x128xf32, #tpu.memory_space<vmem>>, %arg2: memref<2x2x16xf32, #tpu.memory_space<vmem>>, %arg3: memref<1x2xf32, #tpu.memory_space<vmem>>, %arg4: memref<2x16x2xf32, #tpu.memory_space<vmem>>, %arg5: memref<2x1x16xf32, #tpu.memory_space<vmem>>, %arg6: memref<2x16x128xf32, #tpu.memory_space<vmem>>) attributes {dimension_semantics = [#tpu.dimension_semantics<parallel>], iteration_bounds = array<i64: 1>, scalar_prefetch = 0 : i64, scratch_operands = 0 : i64, tpu.core_type = #tpu.core_type<tc>, window_params = [{transform_indices = @transform_0, window_bounds = array<i64: 2, 16, 128>}, {pipeline_mode = #tpu.pipeline_mode<synchronous>, transform_indices = @transform_1, window_bounds = array<i64: 2, 2, 16>}, {pipeline_mode = #tpu.pipeline_mode<synchronous>, transform_indices = @transform_2, window_bounds = array<i64: 1, 2>}, {pipeline_mode = #tpu.pipeline_mode<synchronous>, transform_indices = @transform_3, window_bounds = array<i64: 2, 16, 2>}, {pipeline_mode = #tpu.pipeline_mode<synchronous>, transform_indices = @transform_4, window_bounds = array<i64: 2, 1, 16>}, {transform_indices = @transform_5, window_bounds = array<i64: 2, 16, 128>}]} {
    %c0 = arith.constant 0 : index
    %c0_0 = arith.constant 0 : index
    %c0_1 = arith.constant 0 : index
    %0 = vector.load %arg1[%c0, %c0_0, %c0_1] : memref<2x16x128xf32, #tpu.memory_space<vmem>>, vector<2x16x128xf32>
    %1 = tpu.iota {dimensions = array<i32: 2>} : vector<1x1x128xi32>
    %c0_i32 = arith.constant 0 : i32
    %2 = vector.broadcast %c0_i32 : i32 to vector<1x1x128xi32>
    %3 = arith.cmpi sge, %1, %2 : vector<1x1x128xi32>
    %c64_i32 = arith.constant 64 : i32
    %4 = vector.broadcast %c64_i32 : i32 to vector<1x1x128xi32>
    %5 = arith.cmpi slt, %1, %4 : vector<1x1x128xi32>
    %6 = arith.andi %3, %5 : vector<1x1x128xi1>
    %c64_i32_2 = arith.constant 64 : i32
    %7 = vector.broadcast %c64_i32_2 : i32 to vector<1x1x128xi32>
    %8 = arith.cmpi sge, %1, %7 : vector<1x1x128xi32>
    %c128_i32 = arith.constant 128 : i32
    %9 = vector.broadcast %c128_i32 : i32 to vector<1x1x128xi32>
    %10 = arith.cmpi slt, %1, %9 : vector<1x1x128xi32>
    %11 = arith.andi %8, %10 : vector<1x1x128xi1>
    %c0_3 = arith.constant 0 : index
    %c0_4 = arith.constant 0 : index
    %12 = vector.load %arg3[%c0_3, %c0_4] : memref<1x2xf32, #tpu.memory_space<vmem>>, vector<1x2xf32>
    %c0_i32_5 = arith.constant 0 : i32
    %13 = arith.sitofp %c0_i32_5 : i32 to f32
    %14 = vector.shape_cast %6 : vector<1x1x128xi1> to vector<1x1x128xi1>
    %15 = vector.broadcast %14 : vector<1x1x128xi1> to vector<2x16x128xi1>
    %16 = vector.broadcast %13 : f32 to vector<2x16x128xf32>
    %17 = arith.select %15, %0, %16 : vector<2x16x128xi1>, vector<2x16x128xf32>
    %cst = arith.constant dense<0.000000e+00> : vector<2x16xf32>
    %18 = vector.multi_reduction <add>, %17, %cst [2] : vector<2x16x128xf32> to vector<2x16xf32>
    %cst_6 = arith.constant 1.562500e-02 : f32
    %19 = vector.broadcast %cst_6 : f32 to vector<2x16xf32>
    %20 = arith.mulf %18, %19 : vector<2x16xf32>
    %c0_7 = arith.constant 0 : index
    %c0_8 = arith.constant 0 : index
    %c0_9 = arith.constant 0 : index
    %21 = vector.load %arg2[%c0_7, %c0_8, %c0_9] : memref<2x2x16xf32, #tpu.memory_space<vmem>>, vector<1x2x16xf32>
    %22 = vector.shape_cast %21 : vector<1x2x16xf32> to vector<2x16xf32>
    %23 = vector.shape_cast %20 : vector<2x16xf32> to vector<2x1x16xf32>
    %24 = vector.shape_cast %22 : vector<2x16xf32> to vector<1x2x16xf32>
    %25 = vector.broadcast %23 : vector<2x1x16xf32> to vector<2x2x16xf32>
    %26 = vector.broadcast %24 : vector<1x2x16xf32> to vector<2x2x16xf32>
    %27 = arith.mulf %25, %26 : vector<2x2x16xf32>
    %cst_10 = arith.constant dense<0.000000e+00> : vector<2x2xf32>
    %28 = vector.multi_reduction <add>, %27, %cst_10 [2] : vector<2x2x16xf32> to vector<2x2xf32>
    %29 = vector.broadcast %12 : vector<1x2xf32> to vector<2x2xf32>
    %30 = arith.addf %29, %28 : vector<2x2xf32>
    %c0_i32_11 = arith.constant 0 : i32
    %31 = arith.sitofp %c0_i32_11 : i32 to f32
    %32 = vector.shape_cast %11 : vector<1x1x128xi1> to vector<1x1x128xi1>
    %33 = vector.broadcast %32 : vector<1x1x128xi1> to vector<2x16x128xi1>
    %34 = vector.broadcast %31 : f32 to vector<2x16x128xf32>
    %35 = arith.select %33, %0, %34 : vector<2x16x128xi1>, vector<2x16x128xf32>
    %cst_12 = arith.constant dense<0.000000e+00> : vector<2x16xf32>
    %36 = vector.multi_reduction <add>, %35, %cst_12 [2] : vector<2x16x128xf32> to vector<2x16xf32>
    %cst_13 = arith.constant 1.562500e-02 : f32
    %37 = vector.broadcast %cst_13 : f32 to vector<2x16xf32>
    %38 = arith.mulf %36, %37 : vector<2x16xf32>
    %c1 = arith.constant 1 : index
    %c0_14 = arith.constant 0 : index
    %c0_15 = arith.constant 0 : index
    %39 = vector.load %arg2[%c1, %c0_14, %c0_15] : memref<2x2x16xf32, #tpu.memory_space<vmem>>, vector<1x2x16xf32>
    %40 = vector.shape_cast %39 : vector<1x2x16xf32> to vector<2x16xf32>
    %41 = vector.shape_cast %38 : vector<2x16xf32> to vector<2x1x16xf32>
    %42 = vector.shape_cast %40 : vector<2x16xf32> to vector<1x2x16xf32>
    %43 = vector.broadcast %41 : vector<2x1x16xf32> to vector<2x2x16xf32>
    %44 = vector.broadcast %42 : vector<1x2x16xf32> to vector<2x2x16xf32>
    %45 = arith.mulf %43, %44 : vector<2x2x16xf32>
    %cst_16 = arith.constant dense<0.000000e+00> : vector<2x2xf32>
    %46 = vector.multi_reduction <add>, %45, %cst_16 [2] : vector<2x2x16xf32> to vector<2x2xf32>
    %47 = arith.addf %30, %46 : vector<2x2xf32>
    %cst_17 = arith.constant 0.000000e+00 : f32
    %48 = vector.broadcast %cst_17 : f32 to vector<2x2xf32>
    %49 = arith.maximumf %47, %48 : vector<2x2xf32>
    %c0_18 = arith.constant 0 : index
    %c0_19 = arith.constant 0 : index
    %c0_20 = arith.constant 0 : index
    %50 = vector.load %arg4[%c0_18, %c0_19, %c0_20] : memref<2x16x2xf32, #tpu.memory_space<vmem>>, vector<1x16x2xf32>
    %51 = vector.shape_cast %50 : vector<1x16x2xf32> to vector<16x2xf32>
    %52 = vector.shape_cast %49 : vector<2x2xf32> to vector<2x1x2xf32>
    %53 = vector.shape_cast %51 : vector<16x2xf32> to vector<1x16x2xf32>
    %54 = vector.broadcast %52 : vector<2x1x2xf32> to vector<2x16x2xf32>
    %55 = vector.broadcast %53 : vector<1x16x2xf32> to vector<2x16x2xf32>
    %56 = arith.mulf %54, %55 : vector<2x16x2xf32>
    %cst_21 = arith.constant dense<0.000000e+00> : vector<2x16xf32>
    %57 = vector.multi_reduction <add>, %56, %cst_21 [2] : vector<2x16x2xf32> to vector<2x16xf32>
    %c0_22 = arith.constant 0 : index
    %c0_23 = arith.constant 0 : index
    %c0_24 = arith.constant 0 : index
    %58 = vector.load %arg5[%c0_22, %c0_23, %c0_24] : memref<2x1x16xf32, #tpu.memory_space<vmem>>, vector<1x1x16xf32>
    %59 = vector.shape_cast %58 : vector<1x1x16xf32> to vector<1x16xf32>
    %60 = vector.broadcast %59 : vector<1x16xf32> to vector<2x16xf32>
    %61 = arith.addf %57, %60 : vector<2x16xf32>
    %62 = arith.negf %61 : vector<2x16xf32>
    %63 = math.exp %62 : vector<2x16xf32>
    %cst_25 = arith.constant 1.000000e+00 : f32
    %64 = vector.broadcast %cst_25 : f32 to vector<2x16xf32>
    %65 = arith.addf %64, %63 : vector<2x16xf32>
    %66 = arith.divf %64, %65 : vector<2x16xf32>
    %67 = vector.shape_cast %66 : vector<2x16xf32> to vector<2x16x1xf32>
    %cst_26 = arith.constant 0.000000e+00 : f32
    %68 = vector.shape_cast %6 : vector<1x1x128xi1> to vector<1x1x128xi1>
    %69 = vector.broadcast %68 : vector<1x1x128xi1> to vector<2x16x128xi1>
    %70 = vector.shape_cast %67 : vector<2x16x1xf32> to vector<2x16x1xf32>
    %71 = vector.broadcast %70 : vector<2x16x1xf32> to vector<2x16x128xf32>
    %72 = vector.broadcast %cst_26 : f32 to vector<2x16x128xf32>
    %73 = arith.select %69, %71, %72 : vector<2x16x128xi1>, vector<2x16x128xf32>
    %c1_27 = arith.constant 1 : index
    %c0_28 = arith.constant 0 : index
    %c0_29 = arith.constant 0 : index
    %74 = vector.load %arg4[%c1_27, %c0_28, %c0_29] : memref<2x16x2xf32, #tpu.memory_space<vmem>>, vector<1x16x2xf32>
    %75 = vector.shape_cast %74 : vector<1x16x2xf32> to vector<16x2xf32>
    %76 = vector.shape_cast %49 : vector<2x2xf32> to vector<2x1x2xf32>
    %77 = vector.shape_cast %75 : vector<16x2xf32> to vector<1x16x2xf32>
    %78 = vector.broadcast %76 : vector<2x1x2xf32> to vector<2x16x2xf32>
    %79 = vector.broadcast %77 : vector<1x16x2xf32> to vector<2x16x2xf32>
    %80 = arith.mulf %78, %79 : vector<2x16x2xf32>
    %cst_30 = arith.constant dense<0.000000e+00> : vector<2x16xf32>
    %81 = vector.multi_reduction <add>, %80, %cst_30 [2] : vector<2x16x2xf32> to vector<2x16xf32>
    %c1_31 = arith.constant 1 : index
    %c0_32 = arith.constant 0 : index
    %c0_33 = arith.constant 0 : index
    %82 = vector.load %arg5[%c1_31, %c0_32, %c0_33] : memref<2x1x16xf32, #tpu.memory_space<vmem>>, vector<1x1x16xf32>
    %83 = vector.shape_cast %82 : vector<1x1x16xf32> to vector<1x16xf32>
    %84 = vector.broadcast %83 : vector<1x16xf32> to vector<2x16xf32>
    %85 = arith.addf %81, %84 : vector<2x16xf32>
    %86 = arith.negf %85 : vector<2x16xf32>
    %87 = math.exp %86 : vector<2x16xf32>
    %cst_34 = arith.constant 1.000000e+00 : f32
    %88 = vector.broadcast %cst_34 : f32 to vector<2x16xf32>
    %89 = arith.addf %88, %87 : vector<2x16xf32>
    %90 = arith.divf %88, %89 : vector<2x16xf32>
    %91 = vector.shape_cast %90 : vector<2x16xf32> to vector<2x16x1xf32>
    %cst_35 = arith.constant 0.000000e+00 : f32
    %92 = vector.shape_cast %11 : vector<1x1x128xi1> to vector<1x1x128xi1>
    %93 = vector.broadcast %92 : vector<1x1x128xi1> to vector<2x16x128xi1>
    %94 = vector.shape_cast %91 : vector<2x16x1xf32> to vector<2x16x1xf32>
    %95 = vector.broadcast %94 : vector<2x16x1xf32> to vector<2x16x128xf32>
    %96 = vector.broadcast %cst_35 : f32 to vector<2x16x128xf32>
    %97 = arith.select %93, %95, %96 : vector<2x16x128xi1>, vector<2x16x128xf32>
    %98 = arith.addf %73, %97 : vector<2x16x128xf32>
    %99 = arith.mulf %0, %98 : vector<2x16x128xf32>
    %c0_36 = arith.constant 0 : index
    %c0_37 = arith.constant 0 : index
    %c0_38 = arith.constant 0 : index
    %100 = vector.load %arg6[%c0_36, %c0_37, %c0_38] : memref<2x16x128xf32, #tpu.memory_space<vmem>>, vector<2x16x128xf32>
    tpu.vector_store %arg6[%c0_36, %c0_37, %c0_38], %99 {strides = array<i32>} : memref<2x16x128xf32, #tpu.memory_space<vmem>>, vector<2x16x128xf32>,
    return
  }
  func.func @transform_0(%arg0: i32) -> (i32, i32, i32) {
    %c0_i32 = arith.constant 0 : i32
    %c0_i32_0 = arith.constant 0 : i32
    %c0_i32_1 = arith.constant 0 : i32
    return %arg0, %c0_i32, %c0_i32_0 : i32, i32, i32
  }
  func.func @transform_1(%arg0: i32) -> (i32, i32, i32) {
    %c0_i32 = arith.constant 0 : i32
    %c0_i32_0 = arith.constant 0 : i32
    %c0_i32_1 = arith.constant 0 : i32
    %c0_i32_2 = arith.constant 0 : i32
    return %c0_i32, %c0_i32_0, %c0_i32_1 : i32, i32, i32
  }
  func.func @transform_2(%arg0: i32) -> (i32, i32) {
    %c0_i32 = arith.constant 0 : i32
    %c0_i32_0 = arith.constant 0 : i32
    %c0_i32_1 = arith.constant 0 : i32
    return %c0_i32, %c0_i32_0 : i32, i32
  }
  func.func @transform_3(%arg0: i32) -> (i32, i32, i32) {
    %c0_i32 = arith.constant 0 : i32
    %c0_i32_0 = arith.constant 0 : i32
    %c0_i32_1 = arith.constant 0 : i32
    %c0_i32_2 = arith.constant 0 : i32
    return %c0_i32, %c0_i32_0, %c0_i32_1 : i32, i32, i32
  }
  func.func @transform_4(%arg0: i32) -> (i32, i32, i32) {
    %c0_i32 = arith.constant 0 : i32
    %c0_i32_0 = arith.constant 0 : i32
    %c0_i32_1 = arith.constant 0 : i32
    %c0_i32_2 = arith.constant 0 : i32
    return %c0_i32, %c0_i32_0, %c0_i32_1 : i32, i32, i32
  }
  func.func @transform_5(%arg0: i32) -> (i32, i32, i32) {
    %c0_i32 = arith.constant 0 : i32
    %c0_i32_0 = arith.constant 0 : i32
    %c0_i32_1 = arith.constant 0 : i32
    return %arg0, %c0_i32, %c0_i32_0 : i32, i32, i32
  }
}

</mosaic_0001>

<llo_original>
// kernel: tpu_custom_call.1
$region0: #{tpu_custom_call.1}
  #allocation0 [shape = 'u32[]', space=smem, size = 0x4, offset = 0x4, fixed_abs, tag = 'smem constant byte address 0x4 - core index']
  #allocation1 [shape = 'u32[72,128]{1,0:T(1,128)}', space=vmem, size = 0x9000, scoped, tag = 'internal scratch']
  %s0 = inlined_call_operand.vmem [shape: f32[2,16,128], index: 0, kind: input, shape index: {}]
  %s1 = inlined_call_operand.vmem [shape: f32[2,2,16], index: 1, kind: input, shape index: {}]
  %s2 = inlined_call_operand.hbm [shape: f32[1,2], index: 2, kind: input, shape index: {}]
  %s3 = inlined_call_operand.vmem [shape: f32[2,16,2], index: 3, kind: input, shape index: {}]
  %s4 = inlined_call_operand.vmem [shape: f32[2,1,16], index: 4, kind: input, shape index: {}]
  %s5 = inlined_call_operand.hbm [shape: f32[2,16,128], index: 5, kind: output, shape index: {}]
  %s6 = sld [smem:[#allocation0]]
  $region34: #{tpu_custom_call.1} parent=0
    _
  %s8 = ssub.s32 1, %s6
  %s9 = scalar_select 0, %s8, %s6
  $region1: #{tpu_custom_call.1} parent=0
    #allocation2 [shape = 'u8[512]{0}', space=vmem, size = 0x400, scoped, tag = 'input window, operand 2, single buffered']
    #allocation3 [shape = 's32[1]{0}', space=sflag, size = 0x4, scoped, tag = 'scoped memory for tpu_custom_call.1']
    #allocation4 [shape = 's32[1]{0}', space=sflag, size = 0x4, scoped, tag = 'scoped memory for tpu_custom_call.1']
    #allocation5 [shape = 'u8[16384]{0}', space=vmem, size = 0x4000, scoped, tag = 'output window, operand 0, single buffered']
    %10 = vsyncpa [#allocation3], 0
    %11 = vsyncpa [#allocation4], 0
    // Predicated region
    $region2: #{tpu_custom_call.1} parent=1 // pred_check
      _
    $region3: #{tpu_custom_call.1} parent=1 // pred_check_branch
      %13 = sbr.rel (0) target = $region5
    $region4: #{tpu_custom_call.1} parent=1 // pred_region
      _
    $region5: #{tpu_custom_call.1} parent=1 // pred_fallthru
      _
    // Predicated region
    $region6: #{tpu_custom_call.1} parent=1 // pred_check
      _
    $region7: #{tpu_custom_call.1} parent=1 // pred_check_branch
      %15 = sbr.rel (0) target = $region9
    $region8: #{tpu_custom_call.1} parent=1 // pred_region
      _
    $region9: #{tpu_custom_call.1} parent=1 // pred_fallthru
      _
    // Predicated region
    $region10: #{tpu_custom_call.1} parent=1 // pred_check
      _
    $region11: #{tpu_custom_call.1} parent=1 // pred_check_branch
      %17 = sbr.rel (0) target = $region13
    $region12: #{tpu_custom_call.1} parent=1 // pred_region
      %19 = vsyncadd [#allocation3], 0
      %s21 = sshll.u32 %s2, 4
      %s22 = int_to_ptr.hbm [resolvable:$true] %s21
      %s23 = sshll.u32 [#allocation2], 4
      %s24 = int_to_ptr.vmem [resolvable:$true] %s23
      %26 = dma.hbm_to_vmem [thread:$0]  %s22, 16, %s24, [#allocation3]
    $region13: #{tpu_custom_call.1} parent=1 // pred_fallthru
      _
    // Predicated region
    $region14: #{tpu_custom_call.1} parent=1 // pred_check
      _
    $region15: #{tpu_custom_call.1} parent=1 // pred_check_branch
      %28 = sbr.rel (0) target = $region17
    $region16: #{tpu_custom_call.1} parent=1 // pred_region
      _
    $region17: #{tpu_custom_call.1} parent=1 // pred_fallthru
      _
    // Predicated region
    $region18: #{tpu_custom_call.1} parent=1 // pred_check
      _
    $region19: #{tpu_custom_call.1} parent=1 // pred_check_branch
      %30 = sbr.rel (0) target = $region21
    $region20: #{tpu_custom_call.1} parent=1 // pred_region
      _
    $region21: #{tpu_custom_call.1} parent=1 // pred_fallthru
      _
    // Predicated region
    $region22: #{tpu_custom_call.1} parent=1 // pred_check
      _
    $region23: #{tpu_custom_call.1} parent=1 // pred_check_branch
      %32 = sbr.rel (0) target = $region25
    $region24: #{tpu_custom_call.1} parent=1 // pred_region
      %34 = dma.done [#allocation3], 16
    $region25: #{tpu_custom_call.1} parent=1 // pred_fallthru
      _
    %v35 = vld [vmem:[%s0] sm:$0xff]
    %v36 = vld [vmem:[%s0 + $0x8] sm:$0xff]
    %v37 = vld [vmem:[%s0 + $0x10] sm:$0xff]
    %v38 = vld [vmem:[%s0 + $0x18] sm:$0xff]
    %v39 = vlaneseq
    %v40 = vand.u32 %v39, 127
    %vm41 = vcmp.ge.s32.totalorder %v40, 0
    %vm42 = vcmp.lt.s32.totalorder %v40, 64
    %vm43 = vmand %vm41, %vm42
    %vm44 = vcmp.ge.s32.totalorder %v40, 64
    %vm45 = vcmp.lt.s32.totalorder %v40, 128
    %vm46 = vmand %vm44, %vm45
    %v47 = vld [vmem:[#allocation2] sm:$0x1]
    %v48 = vsel %vm43, 1, 0
    %vm49 = vcmp.eq.s32.totalorder %v48, 1
    %v50 = vsel %vm49, %v35, 0.0
    %v51 = vsel %vm49, %v36, 0.0
    %v52 = vsel %vm49, %v37, 0.0
    %v53 = vsel %vm49, %v38, 0.0
    %54 = vadd.xlane.f32.xlu0 %v50
    %v55 = vpop.xlane.xlu0 %54
    %56 = vadd.xlane.f32.xlu0 %v51
    %v57 = vpop.xlane.xlu0 %56
    %58 = vadd.xlane.f32.xlu0 %v52
    %v59 = vpop.xlane.xlu0 %58
    %60 = vadd.xlane.f32.xlu0 %v53
    %v61 = vpop.xlane.xlu0 %60
    %v62 = vmul.f32 %v55, 0.015625
    %v63 = vmul.f32 %v57, 0.015625
    %v64 = vmul.f32 %v59, 0.015625
    %v65 = vmul.f32 %v61, 0.015625
    %v66 = vld [vmem:[%s1] sm:$0x3]
    %v68 = vperm.slane %v66, 0
    %v69 = vlaneseq
    %v70 = vshrl.u32 %v69, 7
    %72 = vset.pattern.permute.xlu0 %v70
    %73 = vperm.xlu0 %72, %v68
    %v74 = vpop.permute.xlu0 %73
    %v75 = vlaneseq
    %v76 = vshrl.u32 %v75, 7
    %v77 = vadd.s32 %v76, 8
    %78 = vset.pattern.permute.xlu0 %v77
    %79 = vperm.xlu0 %78, %v68
    %v80 = vpop.permute.xlu0 %79
    %v81 = vperm.slane %v66, 1
    %v82 = vlaneseq
    %v83 = vshrl.u32 %v82, 7
    %85 = vset.pattern.permute.xlu0 %v83
    %86 = vperm.xlu0 %85, %v81
    %v87 = vpop.permute.xlu0 %86
    %v88 = vlaneseq
    %v89 = vshrl.u32 %v88, 7
    %v90 = vadd.s32 %v89, 8
    %91 = vset.pattern.permute.xlu0 %v90
    %92 = vperm.xlu0 %91, %v81
    %v93 = vpop.permute.xlu0 %92
    %v98 = vmul.f32 %v62, %v74
    %v99 = vmul.f32 %v63, %v80
    %v100 = vmul.f32 %v62, %v87
    %v101 = vmul.f32 %v63, %v93
    %v102 = vmul.f32 %v64, %v74
    %v103 = vmul.f32 %v65, %v80
    %v104 = vmul.f32 %v64, %v87
    %v105 = vmul.f32 %v65, %v93
    %114 = vset.pattern.permute.xlu0 0
    %115 = vperm.xlu0 %114, %v98
    %v116 = vpop.permute.xlu0 %115
    %117 = vset.pattern.permute.xlu0 0
    %118 = vperm.xlu0 %117, %v99
    %v119 = vpop.permute.xlu0 %118
    %120 = vset.pattern.permute.xlu0 0
    %121 = vperm.xlu0 %120, %v100
    %v122 = vpop.permute.xlu0 %121
    %123 = vset.pattern.permute.xlu0 0
    %124 = vperm.xlu0 %123, %v101
    %v125 = vpop.permute.xlu0 %124
    %126 = vset.pattern.permute.xlu0 0
    %127 = vperm.xlu0 %126, %v102
    %v128 = vpop.permute.xlu0 %127
    %129 = vset.pattern.permute.xlu0 0
    %130 = vperm.xlu0 %129, %v103
    %v131 = vpop.permute.xlu0 %130
    %132 = vset.pattern.permute.xlu0 0
    %133 = vperm.xlu0 %132, %v104
    %v134 = vpop.permute.xlu0 %133
    %135 = vset.pattern.permute.xlu0 0
    %136 = vperm.xlu0 %135, %v105
    %v137 = vpop.permute.xlu0 %136
    %v138 = vperm.slane %v116, %v40
    %v139 = vadd.s32 %v40, 4294967288
    %v140 = vperm.slane %v119, %v139
    %vm141 = vcmask 130112
    %v142 = vsel %vm141, %v140, %v138
    %v143 = vperm.slane %v122, %v40
    %v144 = vperm.slane %v125, %v139
    %v145 = vsel %vm141, %v144, %v143
    %v146 = vperm.slane %v128, %v40
    %v147 = vperm.slane %v131, %v139
    %v148 = vsel %vm141, %v147, %v146
    %v149 = vperm.slane %v134, %v40
    %v150 = vperm.slane %v137, %v139
    %v151 = vsel %vm141, %v150, %v149
    %vm152 = vcmask 1041409
    %v153 = vsel %vm152, %v145, %v142
    %v154 = vsel %vm152, %v151, %v148
    %vm157 = vcmask 123904
    %v158 = vsel %vm157, %v153, 0.0
    %159 = vadd.xlane.f32.xlu0 %v158
    %v160 = vpop.xlane.xlu0 %159
    %v161 = vsel %vm157, %v154, 0.0
    %162 = vadd.xlane.f32.xlu0 %v161
    %v163 = vpop.xlane.xlu0 %162
    %v165 = vperm.slane %v47, 0
    %v169 = vperm.slane %v160, %v40
    %v170 = vperm.slane %v163, %v40
    %v171 = vsel %vm152, %v170, %v169
    %v173 = vadd.f32 %v165, %v171
    %v174 = vsel %vm46, 1, 0
    %vm175 = vcmp.eq.s32.totalorder %v174, 1
    %v176 = vsel %vm175, %v35, 0.0
    %v177 = vsel %vm175, %v36, 0.0
    %v178 = vsel %vm175, %v37, 0.0
    %v179 = vsel %vm175, %v38, 0.0
    %180 = vadd.xlane.f32.xlu0 %v176
    %v181 = vpop.xlane.xlu0 %180
    %182 = vadd.xlane.f32.xlu0 %v177
    %v183 = vpop.xlane.xlu0 %182
    %184 = vadd.xlane.f32.xlu0 %v178
    %v185 = vpop.xlane.xlu0 %184
    %186 = vadd.xlane.f32.xlu0 %v179
    %v187 = vpop.xlane.xlu0 %186
    %v188 = vmul.f32 %v181, 0.015625
    %v189 = vmul.f32 %v183, 0.015625
    %v190 = vmul.f32 %v185, 0.015625
    %v191 = vmul.f32 %v187, 0.015625
    %s192 = scalar_lea.vmem %s1, 2
    %v193 = vld [vmem:[%s192] sm:$0x3]
    %v195 = vperm.slane %v193, 0
    %v196 = vlaneseq
    %v197 = vshrl.u32 %v196, 7
    %199 = vset.pattern.permute.xlu0 %v197
    %200 = vperm.xlu0 %199, %v195
    %v201 = vpop.permute.xlu0 %200
    %v202 = vlaneseq
    %v203 = vshrl.u32 %v202, 7
    %v204 = vadd.s32 %v203, 8
    %205 = vset.pattern.permute.xlu0 %v204
    %206 = vperm.xlu0 %205, %v195
    %v207 = vpop.permute.xlu0 %206
    %v208 = vperm.slane %v193, 1
    %v209 = vlaneseq
    %v210 = vshrl.u32 %v209, 7
    %212 = vset.pattern.permute.xlu0 %v210
    %213 = vperm.xlu0 %212, %v208
    %v214 = vpop.permute.xlu0 %213
    %v215 = vlaneseq
    %v216 = vshrl.u32 %v215, 7
    %v217 = vadd.s32 %v216, 8
    %218 = vset.pattern.permute.xlu0 %v217
    %219 = vperm.xlu0 %218, %v208
    %v220 = vpop.permute.xlu0 %219
    %v225 = vmul.f32 %v188, %v201
    %v226 = vmul.f32 %v189, %v207
    %v227 = vmul.f32 %v188, %v214
    %v228 = vmul.f32 %v189, %v220
    %v229 = vmul.f32 %v190, %v201
    %v230 = vmul.f32 %v191, %v207
    %v231 = vmul.f32 %v190, %v214
    %v232 = vmul.f32 %v191, %v220
    %241 = vset.pattern.permute.xlu0 0
    %242 = vperm.xlu0 %241, %v225
    %v243 = vpop.permute.xlu0 %242
    %244 = vset.pattern.permute.xlu0 0
    %245 = vperm.xlu0 %244, %v226
    %v246 = vpop.permute.xlu0 %245
    %247 = vset.pattern.permute.xlu0 0
    %248 = vperm.xlu0 %247, %v227
    %v249 = vpop.permute.xlu0 %248
    %250 = vset.pattern.permute.xlu0 0
    %251 = vperm.xlu0 %250, %v228
    %v252 = vpop.permute.xlu0 %251
    %253 = vset.pattern.permute.xlu0 0
    %254 = vperm.xlu0 %253, %v229
    %v255 = vpop.permute.xlu0 %254
    %256 = vset.pattern.permute.xlu0 0
    %257 = vperm.xlu0 %256, %v230
    %v258 = vpop.permute.xlu0 %257
    %259 = vset.pattern.permute.xlu0 0
    %260 = vperm.xlu0 %259, %v231
    %v261 = vpop.permute.xlu0 %260
    %262 = vset.pattern.permute.xlu0 0
    %263 = vperm.xlu0 %262, %v232
    %v264 = vpop.permute.xlu0 %263
    %v265 = vperm.slane %v243, %v40
    %v266 = vperm.slane %v246, %v139
    %v267 = vsel %vm141, %v266, %v265
    %v268 = vperm.slane %v249, %v40
    %v269 = vperm.slane %v252, %v139
    %v270 = vsel %vm141, %v269, %v268
    %v271 = vperm.slane %v255, %v40
    %v272 = vperm.slane %v258, %v139
    %v273 = vsel %vm141, %v272, %v271
    %v274 = vperm.slane %v261, %v40
    %v275 = vperm.slane %v264, %v139
    %v276 = vsel %vm141, %v275, %v274
    %v277 = vsel %vm152, %v270, %v267
    %v278 = vsel %vm152, %v276, %v273
    %v281 = vsel %vm157, %v277, 0.0
    %282 = vadd.xlane.f32.xlu0 %v281
    %v283 = vpop.xlane.xlu0 %282
    %v284 = vsel %vm157, %v278, 0.0
    %285 = vadd.xlane.f32.xlu0 %v284
    %v286 = vpop.xlane.xlu0 %285
    %v289 = vperm.slane %v283, %v40
    %v290 = vperm.slane %v286, %v40
    %v291 = vsel %vm152, %v290, %v289
    %v293 = vadd.f32 %v173, %v291
    %v294 = vmax.f32 %v293, 0.0
    %v295 = vld [vmem:[%s3] sm:$0xff]
    %v296 = vld [vmem:[%s3 + $0x8] sm:$0xff]
    %v298 = vrot.slane %v294, 1
    %v299 = vperm.slane %v294, 0
    %v300 = vperm.slane %v298, 0
    %v303 = vmul.f32 %v299, %v295
    %v304 = vmul.f32 %v299, %v296
    %v305 = vmul.f32 %v300, %v295
    %v306 = vmul.f32 %v300, %v296
    %vm307 = vcmask 15360
    %v308 = vsel %vm307, %v303, 0.0
    %309 = vadd.xlane.f32.xlu0 %v308
    %v310 = vpop.xlane.xlu0 %309
    %v311 = vsel %vm307, %v304, 0.0
    %312 = vadd.xlane.f32.xlu0 %v311
    %v313 = vpop.xlane.xlu0 %312
    %v314 = vsel %vm307, %v305, 0.0
    %315 = vadd.xlane.f32.xlu0 %v314
    %v316 = vpop.xlane.xlu0 %315
    %v317 = vsel %vm307, %v306, 0.0
    %318 = vadd.xlane.f32.xlu0 %v317
    %v319 = vpop.xlane.xlu0 %318
    %v320 = vld [vmem:[%s4] sm:$0x1]
    %v322 = vperm.slane %v320, 0
    %v323 = vlaneseq
    %v324 = vshrl.u32 %v323, 7
    %326 = vset.pattern.permute.xlu0 %v324
    %327 = vperm.xlu0 %326, %v322
    %v328 = vpop.permute.xlu0 %327
    %v329 = vlaneseq
    %v330 = vshrl.u32 %v329, 7
    %v331 = vadd.s32 %v330, 8
    %332 = vset.pattern.permute.xlu0 %v331
    %333 = vperm.xlu0 %332, %v322
    %v334 = vpop.permute.xlu0 %333
    %v337 = vadd.f32 %v310, %v328
    %v338 = vadd.f32 %v313, %v334
    %v339 = vadd.f32 %v316, %v328
    %v340 = vadd.f32 %v319, %v334
    %v341 = vxor.u32 %v337, 2147483648
    %v342 = vxor.u32 %v338, 2147483648
    %v343 = vxor.u32 %v339, 2147483648
    %v344 = vxor.u32 %v340, 2147483648
    %v345 = vmul.f32 %v341, 1.442695
    %v346 = vpow.pop %v345
    %v347 = vmul.f32 %v342, 1.442695
    %v348 = vpow.pop %v347
    %v349 = vmul.f32 %v343, 1.442695
    %v350 = vpow.pop %v349
    %v351 = vmul.f32 %v344, 1.442695
    %v352 = vpow.pop %v351
    %v353 = vadd.f32 %v346, 1.0
    %v354 = vadd.f32 %v348, 1.0
    %v355 = vadd.f32 %v350, 1.0
    %v356 = vadd.f32 %v352, 1.0
    %v357 = vrcp.pop %v353
    %v358 = vmul.f32 %v353, %v357
    %v359 = vsub.f32 1.0, %v358
    %v360 = vmul.f32 %v357, %v359
    %v361 = vadd.f32 %v357, %v360
    %vm362 = vweird.f32 %v353
    %vm363 = vweird.f32 %v357
    %vm364 = vmor %vm362, %vm363
    %v365 = vsel %vm364, %v357, %v361
    %v366 = vand.u32 2147483647, %v353
    %vm367 = vcmp.eq.f32.partialorder %v366, 8.507059e+37
    %v368 = vand.u32 %v353, 2147483648
    %v369 = vor.u32 1.1754944e-38, %v368
    %v370 = vsel %vm367, %v369, %v365
    %v371 = vmul.f32 1.0, %v370
    %v372 = vrcp.pop %v354
    %v373 = vmul.f32 %v354, %v372
    %v374 = vsub.f32 1.0, %v373
    %v375 = vmul.f32 %v372, %v374
    %v376 = vadd.f32 %v372, %v375
    %vm377 = vweird.f32 %v354
    %vm378 = vweird.f32 %v372
    %vm379 = vmor %vm377, %vm378
    %v380 = vsel %vm379, %v372, %v376
    %v381 = vand.u32 2147483647, %v354
    %vm382 = vcmp.eq.f32.partialorder %v381, 8.507059e+37
    %v383 = vand.u32 %v354, 2147483648
    %v384 = vor.u32 1.1754944e-38, %v383
    %v385 = vsel %vm382, %v384, %v380
    %v386 = vmul.f32 1.0, %v385
    %v387 = vrcp.pop %v355
    %v388 = vmul.f32 %v355, %v387
    %v389 = vsub.f32 1.0, %v388
    %v390 = vmul.f32 %v387, %v389
    %v391 = vadd.f32 %v387, %v390
    %vm392 = vweird.f32 %v355
    %vm393 = vweird.f32 %v387
    %vm394 = vmor %vm392, %vm393
    %v395 = vsel %vm394, %v387, %v391
    %v396 = vand.u32 2147483647, %v355
    %vm397 = vcmp.eq.f32.partialorder %v396, 8.507059e+37
    %v398 = vand.u32 %v355, 2147483648
    %v399 = vor.u32 1.1754944e-38, %v398
    %v400 = vsel %vm397, %v399, %v395
    %v401 = vmul.f32 1.0, %v400
    %v402 = vrcp.pop %v356
    %v403 = vmul.f32 %v356, %v402
    %v404 = vsub.f32 1.0, %v403
    %v405 = vmul.f32 %v402, %v404
    %v406 = vadd.f32 %v402, %v405
    %vm407 = vweird.f32 %v356
    %vm408 = vweird.f32 %v402
    %vm409 = vmor %vm407, %vm408
    %v410 = vsel %vm409, %v402, %v406
    %v411 = vand.u32 2147483647, %v356
    %vm412 = vcmp.eq.f32.partialorder %v411, 8.507059e+37
    %v413 = vand.u32 %v356, 2147483648
    %v414 = vor.u32 1.1754944e-38, %v413
    %v415 = vsel %vm412, %v414, %v410
    %v416 = vmul.f32 1.0, %v415
    %418 = vset.pattern.permute.xlu0 0
    %419 = vperm.xlu0 %418, %v371
    %v420 = vpop.permute.xlu0 %419
    %423 = vset.pattern.permute.xlu0 0
    %424 = vperm.xlu0 %423, %v386
    %v425 = vpop.permute.xlu0 %424
    %428 = vset.pattern.permute.xlu0 0
    %429 = vperm.xlu0 %428, %v401
    %v430 = vpop.permute.xlu0 %429
    %433 = vset.pattern.permute.xlu0 0
    %434 = vperm.xlu0 %433, %v416
    %v435 = vpop.permute.xlu0 %434
    %v437 = vsel %vm49, %v420, 0.0
    %v438 = vsel %vm49, %v425, 0.0
    %v439 = vsel %vm49, %v430, 0.0
    %v440 = vsel %vm49, %v435, 0.0
    %s441 = scalar_lea.vmem %s3, 16
    %v442 = vld [vmem:[%s441] sm:$0xff]
    %v443 = vld [vmem:[%s441 + $0x8] sm:$0xff]
    %v444 = vmul.f32 %v299, %v442
    %v445 = vmul.f32 %v299, %v443
    %v446 = vmul.f32 %v300, %v442
    %v447 = vmul.f32 %v300, %v443
    %v448 = vsel %vm307, %v444, 0.0
    %449 = vadd.xlane.f32.xlu0 %v448
    %v450 = vpop.xlane.xlu0 %449
    %v451 = vsel %vm307, %v445, 0.0
    %452 = vadd.xlane.f32.xlu0 %v451
    %v453 = vpop.xlane.xlu0 %452
    %v454 = vsel %vm307, %v446, 0.0
    %455 = vadd.xlane.f32.xlu0 %v454
    %v456 = vpop.xlane.xlu0 %455
    %v457 = vsel %vm307, %v447, 0.0
    %458 = vadd.xlane.f32.xlu0 %v457
    %v459 = vpop.xlane.xlu0 %458
    %s460 = scalar_lea.vmem %s4, 1
    %v461 = vld [vmem:[%s460] sm:$0x1]
    %v463 = vperm.slane %v461, 0
    %v464 = vlaneseq
    %v465 = vshrl.u32 %v464, 7
    %467 = vset.pattern.permute.xlu0 %v465
    %468 = vperm.xlu0 %467, %v463
    %v469 = vpop.permute.xlu0 %468
    %v470 = vlaneseq
    %v471 = vshrl.u32 %v470, 7
    %v472 = vadd.s32 %v471, 8
    %473 = vset.pattern.permute.xlu0 %v472
    %474 = vperm.xlu0 %473, %v463
    %v475 = vpop.permute.xlu0 %474
    %v478 = vadd.f32 %v450, %v469
    %v479 = vadd.f32 %v453, %v475
    %v480 = vadd.f32 %v456, %v469
    %v481 = vadd.f32 %v459, %v475
    %v482 = vxor.u32 %v478, 2147483648
    %v483 = vxor.u32 %v479, 2147483648
    %v484 = vxor.u32 %v480, 2147483648
    %v485 = vxor.u32 %v481, 2147483648
    %v486 = vmul.f32 %v482, 1.442695
    %v487 = vpow.pop %v486
    %v488 = vmul.f32 %v483, 1.442695
    %v489 = vpow.pop %v488
    %v490 = vmul.f32 %v484, 1.442695
    %v491 = vpow.pop %v490
    %v492 = vmul.f32 %v485, 1.442695
    %v493 = vpow.pop %v492
    %v494 = vadd.f32 %v487, 1.0
    %v495 = vadd.f32 %v489, 1.0
    %v496 = vadd.f32 %v491, 1.0
    %v497 = vadd.f32 %v493, 1.0
    %v498 = vrcp.pop %v494
    %v499 = vmul.f32 %v494, %v498
    %v500 = vsub.f32 1.0, %v499
    %v501 = vmul.f32 %v498, %v500
    %v502 = vadd.f32 %v498, %v501
    %vm503 = vweird.f32 %v494
    %vm504 = vweird.f32 %v498
    %vm505 = vmor %vm503, %vm504
    %v506 = vsel %vm505, %v498, %v502
    %v507 = vand.u32 2147483647, %v494
    %vm508 = vcmp.eq.f32.partialorder %v507, 8.507059e+37
    %v509 = vand.u32 %v494, 2147483648
    %v510 = vor.u32 1.1754944e-38, %v509
    %v511 = vsel %vm508, %v510, %v506
    %v512 = vmul.f32 1.0, %v511
    %v513 = vrcp.pop %v495
    %v514 = vmul.f32 %v495, %v513
    %v515 = vsub.f32 1.0, %v514
    %v516 = vmul.f32 %v513, %v515
    %v517 = vadd.f32 %v513, %v516
    %vm518 = vweird.f32 %v495
    %vm519 = vweird.f32 %v513
    %vm520 = vmor %vm518, %vm519
    %v521 = vsel %vm520, %v513, %v517
    %v522 = vand.u32 2147483647, %v495
    %vm523 = vcmp.eq.f32.partialorder %v522, 8.507059e+37
    %v524 = vand.u32 %v495, 2147483648
    %v525 = vor.u32 1.1754944e-38, %v524
    %v526 = vsel %vm523, %v525, %v521
    %v527 = vmul.f32 1.0, %v526
    %v528 = vrcp.pop %v496
    %v529 = vmul.f32 %v496, %v528
    %v530 = vsub.f32 1.0, %v529
    %v531 = vmul.f32 %v528, %v530
    %v532 = vadd.f32 %v528, %v531
    %vm533 = vweird.f32 %v496
    %vm534 = vweird.f32 %v528
    %vm535 = vmor %vm533, %vm534
    %v536 = vsel %vm535, %v528, %v532
    %v537 = vand.u32 2147483647, %v496
    %vm538 = vcmp.eq.f32.partialorder %v537, 8.507059e+37
    %v539 = vand.u32 %v496, 2147483648
    %v540 = vor.u32 1.1754944e-38, %v539
    %v541 = vsel %vm538, %v540, %v536
    %v542 = vmul.f32 1.0, %v541
    %v543 = vrcp.pop %v497
    %v544 = vmul.f32 %v497, %v543
    %v545 = vsub.f32 1.0, %v544
    %v546 = vmul.f32 %v543, %v545
    %v547 = vadd.f32 %v543, %v546
    %vm548 = vweird.f32 %v497
    %vm549 = vweird.f32 %v543
    %vm550 = vmor %vm548, %vm549
    %v551 = vsel %vm550, %v543, %v547
    %v552 = vand.u32 2147483647, %v497
    %vm553 = vcmp.eq.f32.partialorder %v552, 8.507059e+37
    %v554 = vand.u32 %v497, 2147483648
    %v555 = vor.u32 1.1754944e-38, %v554
    %v556 = vsel %vm553, %v555, %v551
    %v557 = vmul.f32 1.0, %v556
    %559 = vset.pattern.permute.xlu0 0
    %560 = vperm.xlu0 %559, %v512
    %v561 = vpop.permute.xlu0 %560
    %564 = vset.pattern.permute.xlu0 0
    %565 = vperm.xlu0 %564, %v527
    %v566 = vpop.permute.xlu0 %565
    %569 = vset.pattern.permute.xlu0 0
    %570 = vperm.xlu0 %569, %v542
    %v571 = vpop.permute.xlu0 %570
    %574 = vset.pattern.permute.xlu0 0
    %575 = vperm.xlu0 %574, %v557
    %v576 = vpop.permute.xlu0 %575
    %v578 = vsel %vm175, %v561, 0.0
    %v579 = vsel %vm175, %v566, 0.0
    %v580 = vsel %vm175, %v571, 0.0
    %v581 = vsel %vm175, %v576, 0.0
    %v582 = vadd.f32 %v437, %v578
    %v583 = vadd.f32 %v438, %v579
    %v584 = vadd.f32 %v439, %v580
    %v585 = vadd.f32 %v440, %v581
    %v586 = vmul.f32 %v35, %v582
    %v587 = vmul.f32 %v36, %v583
    %v588 = vmul.f32 %v37, %v584
    %v589 = vmul.f32 %v38, %v585
    %590 = vst [vmem:[#allocation5] sm:$0xff] %v586
    %591 = vst [vmem:[#allocation5 + $0x8] sm:$0xff] %v587
    %592 = vst [vmem:[#allocation5 + $0x10] sm:$0xff] %v588
    %593 = vst [vmem:[#allocation5 + $0x18] sm:$0xff] %v589
    // Predicated region
    $region26: #{tpu_custom_call.1} parent=1 // pred_check
      _
    $region27: #{tpu_custom_call.1} parent=1 // pred_check_branch
      %595 = sbr.rel (0) target = $region29
    $region28: #{tpu_custom_call.1} parent=1 // pred_region
      %597 = vsyncadd [#allocation4], 0
      %s598 = sshll.u32 [#allocation5], 4
      %s599 = int_to_ptr.vmem [resolvable:$true] %s598
      %s600 = sshll.u32 %s5, 4
      %s601 = int_to_ptr.hbm [resolvable:$true] %s600
      %606 = dma.vmem_to_hbm [thread:$0]  %s599, 512, %s601, [#allocation4], 128, 128, 8
    $region29: #{tpu_custom_call.1} parent=1 // pred_fallthru
      _
    // Predicated region
    $region30: #{tpu_custom_call.1} parent=1 // pred_check
      _
    $region31: #{tpu_custom_call.1} parent=1 // pred_check_branch
      %608 = sbr.rel (0) target = $region33
    $region32: #{tpu_custom_call.1} parent=1 // pred_region
      %610 = dma.done [#allocation4], 512
    $region33: #{tpu_custom_call.1} parent=1 // pred_fallthru
      _
    %611 = vsyncpa [#allocation3], 1
    %612 = vsyncpa [#allocation4], 1

</llo_original>
